<compile_context>
chip_gen: v5e
topology: v5e:2x2
jax: 0.10.0
libtpu: 0.0.40
codegen_flags: <defaults>
</compile_context>

<pallas_src>
import functools

import jax
import jax.numpy as jnp
from jax.experimental import pallas as pl
from jax.experimental.pallas import tpu as pltpu

_MiB = 1024 * 1024


# ---------------------------------------------------------------------------
# Hardware-aware sizing
# ---------------------------------------------------------------------------
def _tpu_sizing():
    """Return (vmem_limit_bytes, per-block budget, assumed #TensorCores/chip).

    v5e/v6e: 128 MiB VMEM, 1 TC  -> ~96 MiB scoped limit, 16 MiB blocks.
    v7x    :  64 MiB VMEM, 2 TCs -> ~48 MiB scoped limit,  8 MiB blocks.
    """
    vmem_cap = 128 * _MiB
    try:
        vmem_cap = int(pltpu.get_tpu_info().vmem_capacity_bytes)
    except Exception:
        pass
    vmem_limit = int(vmem_cap * 0.75)
    if vmem_cap <= 80 * _MiB:          # v7x-class part (64 MiB per TC, 2 TCs)
        return vmem_limit, 8 * _MiB, 2
    return vmem_limit, 16 * _MiB, 1


def _pick_batch_tile(B, bytes_per_image, block_budget, num_cores, requested=None):
    """Largest divisor of B within the VMEM budget; on multi-TC parts cap it
    so each core gets >= ~3 pipeline steps (hides load/writeback); on 1-TC
    parts just maximize the block.  Non-divisor requests degrade gracefully."""
    max_bt_mem = max(1, block_budget // max(1, bytes_per_image))
    if requested is not None:
        limit = min(B, max(1, int(requested)), max_bt_mem)
    else:
        cap = B if num_cores <= 1 else max(1, B // (num_cores * 3))
        limit = min(max_bt_mem, cap, B)
    bt = 1
    for d in range(1, B + 1):
        if B % d == 0 and d <= limit:
            bt = d
    return bt


def _pick_hw_tile(hwp, C, itemsize, block_budget):
    """Largest multiple of 128 dividing the padded HW that fits the budget."""
    n128 = hwp // 128
    max_mult = max(1, block_budget // max(1, C * 128 * itemsize))
    best = 1
    for d in range(1, n128 + 1):
        if n128 % d == 0 and d <= max_mult:
            best = d
    return 128 * best


# ---------------------------------------------------------------------------
# Kernels
# ---------------------------------------------------------------------------
def _se_whole_kernel(x_ref, w1t_ref, w2t_ref, o_ref, *, inv_hw):
    """Path A: one (Bt, C, HWp) block = pool + excitation + scale, 1 HBM pass."""
    x = x_ref[...]                                             # native dtype
    # Squeeze: f32-accumulated lane reduction, no f32 copy of the block.
    pooled = jnp.sum(x, axis=-1, dtype=jnp.float32) * inv_hw   # (Bt, C) f32
    # Excitation on the MXU; weights pre-transposed in the wrapper.
    h = jnp.dot(pooled, w1t_ref[...].astype(jnp.float32),
                preferred_element_type=jnp.float32)            # (Bt, Hid)
    h = jnp.maximum(h, 0.0)
    y = jnp.dot(h, w2t_ref[...].astype(jnp.float32),
                preferred_element_type=jnp.float32)            # (Bt, C)
    scale = jax.nn.sigmoid(y)                                  # (Bt, C) f32
    # Scale in the input dtype -> lane-dense, unmasked stores.
    o_ref[...] = (x * scale.astype(x.dtype)[:, :, None]).astype(o_ref.dtype)


def _se_pool_kernel(x_ref, w1t_ref, w2t_ref, scale_ref, acc_ref, *, inv_hw):
    """Path B pass 1: spatially tiled squeeze + excitation. grid=(B, n_hw)."""
    h_idx = pl.program_id(1)

    @pl.when(h_idx == 0)
    def _():
        acc_ref[...] = jnp.zeros_like(acc_ref)

    acc_ref[...] += jnp.sum(x_ref[...], axis=-1, dtype=jnp.float32)   # (1, C)

    @pl.when(h_idx == pl.num_programs(1) - 1)
    def _():
        pooled = acc_ref[...] * inv_hw                         # (1, C) f32
        hdn = jnp.maximum(
            jnp.dot(pooled, w1t_ref[...].astype(jnp.float32),
                    preferred_element_type=jnp.float32), 0.0)  # (1, Hid)
        y = jnp.dot(hdn, w2t_ref[...].astype(jnp.float32),
                    preferred_element_type=jnp.float32)        # (1, C)
        scale_ref[...] = jax.nn.sigmoid(y)[:, None, :]         # (1, 1, C)


def _se_scale_kernel(x_ref, scale_ref, o_ref):
    """Path B pass 2: apply per-channel scale to one (1, C, Th) spatial tile."""
    x = x_ref[...]
    s = scale_ref[...].astype(x.dtype)                         # (1, C, 1)
    o_ref[...] = (x * s).astype(o_ref.dtype)


# ---------------------------------------------------------------------------
# Wrapper
# ---------------------------------------------------------------------------
def se_layer(x, w1, w2, *, batch_tile=None, block_budget=None):
    """x: (B, C, H, W); w1: (Hid, C), w2: (C, Hid) -- PyTorch nn.Linear
    (out, in) layout, bias-free.  Returns x * sigmoid(fc2(relu(fc1(avgpool(x)))))."""
    B, C, H, W = x.shape
    HW = H * W
    hid = w1.shape[0]
    assert w1.shape == (hid, C) and w2.shape == (C, hid)

    vmem_limit, default_budget, num_cores = _tpu_sizing()
    if block_budget is None:
        block_budget = default_budget

    # Pre-transpose weights once in the wrapper -> plain matmuls in-kernel.
    w1t = jnp.transpose(w1)            # (C, Hid)
    w2t = jnp.transpose(w2)            # (Hid, C)

    # Lane-dense spatial axis: (B,C,H,W) -> (B,C,HW), zero-padded to a multiple
    # of 128 if needed (exact: mean divides by true HW, pad sliced off after).
    x2 = x.reshape(B, C, HW)
    hwp = -(-HW // 128) * 128
    if hwp != HW:
        x2 = jnp.pad(x2, ((0, 0), (0, 0), (0, hwp - HW)))

    itemsize = jnp.dtype(x.dtype).itemsize
    inv_hw = float(1.0 / HW)
    bytes_per_image = C * hwp * itemsize
    cparams = dict(vmem_limit_bytes=vmem_limit)

    if bytes_per_image <= block_budget:
        # ---- Path A: whole image(s) per grid step, single HBM pass ----
        bt = _pick_batch_tile(B, bytes_per_image, block_budget, num_cores,
                              requested=batch_tile)
        out = pl.pallas_call(
            functools.partial(_se_whole_kernel, inv_hw=inv_hw),
            out_shape=jax.ShapeDtypeStruct((B, C, hwp), x.dtype),
            grid_spec=pltpu.PrefetchScalarGridSpec(
                num_scalar_prefetch=0,
                grid=(B // bt,),
                in_specs=[
                    pl.BlockSpec((bt, C, hwp), lambda b: (b, 0, 0)),
                    # Weights: constant index_map -> fetched once, VMEM-resident.
                    pl.BlockSpec((C, hid), lambda b: (0, 0)),
                    pl.BlockSpec((hid, C), lambda b: (0, 0)),
                ],
                out_specs=pl.BlockSpec((bt, C, hwp), lambda b: (b, 0, 0)),
            ),
            compiler_params=pltpu.CompilerParams(
                dimension_semantics=("parallel",), **cparams),
        )(x2, w1t, w2t)
    else:
        # ---- Path B: spatially tiled two-phase (pool+excite, then scale) ----
        th = _pick_hw_tile(hwp, C, itemsize, block_budget)
        n_hw = hwp // th

        scale = pl.pallas_call(
            functools.partial(_se_pool_kernel, inv_hw=inv_hw),
            out_shape=jax.ShapeDtypeStruct((B, 1, C), jnp.float32),
            grid_spec=pltpu.PrefetchScalarGridSpec(
                num_scalar_prefetch=0,
                grid=(B, n_hw),
                in_specs=[
                    pl.BlockSpec((1, C, th), lambda b, h: (b, 0, h)),
                    pl.BlockSpec((C, hid), lambda b, h: (0, 0)),
                    pl.BlockSpec((hid, C), lambda b, h: (0, 0)),
                ],
                out_specs=pl.BlockSpec((1, 1, C), lambda b, h: (b, 0, 0)),
                scratch_shapes=[pltpu.VMEM((1, C), jnp.float32)],
            ),
            compiler_params=pltpu.CompilerParams(
                dimension_semantics=("parallel", "arbitrary"), **cparams),
        )(x2, w1t, w2t)

        # Tiny (B, C) relayout done once in XLA so neither kernel needs an
        # in-kernel transpose; the scale pass then broadcasts along lanes.
        scale = scale.reshape(B, C, 1)

        out = pl.pallas_call(
            _se_scale_kernel,
            out_shape=jax.ShapeDtypeStruct((B, C, hwp), x.dtype),
            grid_spec=pltpu.PrefetchScalarGridSpec(
                num_scalar_prefetch=0,
                grid=(B, n_hw),
                in_specs=[
                    pl.BlockSpec((1, C, th), lambda b, h: (b, 0, h)),
                    pl.BlockSpec((1, C, 1), lambda b, h: (b, 0, 0)),
                ],
                out_specs=pl.BlockSpec((1, C, th), lambda b, h: (b, 0, h)),
            ),
            compiler_params=pltpu.CompilerParams(
                dimension_semantics=("parallel", "parallel"), **cparams),
        )(x2, scale)

    if hwp != HW:
        out = out[:, :, :HW]
    return out.reshape(B, C, H, W)


def se_layer_ref(x, w1, w2):
    pooled = jnp.mean(x, axis=(2, 3))                 # (B, C)
    h = jnp.maximum(pooled @ w1.T, 0.0)               # (B, Hid)
    y = jax.nn.sigmoid(h @ w2.T)                      # (B, C)
    return x * y[:, :, None, None]


if __name__ == "__main__":
    key = jax.random.PRNGKey(0)

    def make_case(k, B, C, H, W, reduction):
        hid = max(1, C // reduction)
        kx, k1, k2 = jax.random.split(k, 3)
        x = jax.random.normal(kx, (B, C, H, W), dtype=jnp.float32)
        w1 = jax.random.normal(k1, (hid, C), dtype=jnp.float32) * 0.1  # fc1
        w2 = jax.random.normal(k2, (C, hid), dtype=jnp.float32) * 0.1  # fc2
        return x, w1, w2

    ka, kb, kc = jax.random.split(key, 3)
    # Tolerance covers MXU f32 matmul rounding vs the plain-XLA reference.
    TOL = dict(atol=2e-4, rtol=2e-4)

    # Case 1: HW multiple of 128 -> whole-image path (Path A).
    x, w1, w2 = make_case(ka, 4, 32, 16, 16, 4)
    out = jax.block_until_ready(se_layer(x, w1, w2))
    assert out.shape == x.shape
    assert jnp.allclose(out, se_layer_ref(x, w1, w2), **TOL)

    # Case 2: force the spatially tiled two-phase path (Path B) by shrinking
    # the per-block budget, so the production-shape code path is exercised.
    x, w1, w2 = make_case(kb, 2, 32, 16, 16, 4)
    out = jax.block_until_ready(se_layer(x, w1, w2, block_budget=16 * 1024))
    assert jnp.allclose(out, se_layer_ref(x, w1, w2), **TOL)

    # Case 3: HW not a multiple of 128 (7x7) -> zero-padded lane-dense path.
    x, w1, w2 = make_case(kc, 2, 16, 7, 7, 4)
    out = jax.block_until_ready(se_layer(x, w1, w2))
    assert jnp.allclose(out, se_layer_ref(x, w1, w2), **TOL)

    print("KERNEL_OK")
</pallas_src>

<mosaic_0001>
module attributes {stable_mosaic.version = 11 : i64} {
  func.func @_se_whole_kernel(%arg0: i32, %arg1: memref<4x32x256xf32, #tpu.memory_space<vmem>>, %arg2: memref<32x8xf32, #tpu.memory_space<vmem>>, %arg3: memref<8x32xf32, #tpu.memory_space<vmem>>, %arg4: memref<4x32x256xf32, #tpu.memory_space<vmem>>) attributes {dimension_semantics = [#tpu.dimension_semantics<parallel>], iteration_bounds = array<i64: 1>, scalar_prefetch = 0 : i64, scratch_operands = 0 : i64, tpu.core_type = #tpu.core_type<tc>, window_params = [{transform_indices = @transform_0, window_bounds = array<i64: 4, 32, 256>}, {pipeline_mode = #tpu.pipeline_mode<synchronous>, transform_indices = @transform_1, window_bounds = array<i64: 32, 8>}, {pipeline_mode = #tpu.pipeline_mode<synchronous>, transform_indices = @transform_2, window_bounds = array<i64: 8, 32>}, {transform_indices = @transform_3, window_bounds = array<i64: 4, 32, 256>}]} {
    %c0 = arith.constant 0 : index
    %c0_0 = arith.constant 0 : index
    %c0_1 = arith.constant 0 : index
    %0 = vector.load %arg1[%c0, %c0_0, %c0_1] : memref<4x32x256xf32, #tpu.memory_space<vmem>>, vector<4x32x256xf32>
    %cst = arith.constant dense<0.000000e+00> : vector<4x32xf32>
    %1 = vector.multi_reduction <add>, %0, %cst [2] : vector<4x32x256xf32> to vector<4x32xf32>
    %cst_2 = arith.constant 3.906250e-03 : f32
    %2 = vector.broadcast %cst_2 : f32 to vector<4x32xf32>
    %3 = arith.mulf %1, %2 : vector<4x32xf32>
    %c0_3 = arith.constant 0 : index
    %c0_4 = arith.constant 0 : index
    %4 = vector.load %arg2[%c0_3, %c0_4] : memref<32x8xf32, #tpu.memory_space<vmem>>, vector<32x8xf32>
    %cst_5 = arith.constant dense<0.000000e+00> : vector<4x8xf32>
    %5 = tpu.matmul %3, %4, %cst_5 {dimension_numbers = #tpu.dot_dimension_numbers<[1], [0], [0], [1], [0, 0, 1, 1], [], []>} : vector<4x32xf32>, vector<32x8xf32>, vector<4x8xf32> -> vector<4x8xf32>
    %cst_6 = arith.constant 0.000000e+00 : f32
    %6 = vector.broadcast %cst_6 : f32 to vector<4x8xf32>
    %7 = arith.maximumf %5, %6 : vector<4x8xf32>
    %c0_7 = arith.constant 0 : index
    %c0_8 = arith.constant 0 : index
    %8 = vector.load %arg3[%c0_7, %c0_8] : memref<8x32xf32, #tpu.memory_space<vmem>>, vector<8x32xf32>
    %cst_9 = arith.constant dense<0.000000e+00> : vector<4x32xf32>
    %9 = tpu.matmul %7, %8, %cst_9 {dimension_numbers = #tpu.dot_dimension_numbers<[1], [0], [0], [1], [0, 0, 1, 1], [], []>} : vector<4x8xf32>, vector<8x32xf32>, vector<4x32xf32> -> vector<4x32xf32>
    %10 = arith.negf %9 : vector<4x32xf32>
    %11 = math.exp %10 : vector<4x32xf32>
    %cst_10 = arith.constant 1.000000e+00 : f32
    %12 = vector.broadcast %cst_10 : f32 to vector<4x32xf32>
    %13 = arith.addf %12, %11 : vector<4x32xf32>
    %14 = arith.divf %12, %13 : vector<4x32xf32>
    %15 = vector.shape_cast %14 : vector<4x32xf32> to vector<4x32x1xf32>
    %16 = vector.broadcast %15 : vector<4x32x1xf32> to vector<4x32x256xf32>
    %17 = arith.mulf %0, %16 : vector<4x32x256xf32>
    %c0_11 = arith.constant 0 : index
    %c0_12 = arith.constant 0 : index
    %c0_13 = arith.constant 0 : index
    %18 = vector.load %arg4[%c0_11, %c0_12, %c0_13] : memref<4x32x256xf32, #tpu.memory_space<vmem>>, vector<4x32x256xf32>
    tpu.vector_store %arg4[%c0_11, %c0_12, %c0_13], %17 {strides = array<i32>} : memref<4x32x256xf32, #tpu.memory_space<vmem>>, vector<4x32x256xf32>,
    return
  }
  func.func @transform_0(%arg0: i32) -> (i32, i32, i32) {
    %c0_i32 = arith.constant 0 : i32
    %c0_i32_0 = arith.constant 0 : i32
    %c0_i32_1 = arith.constant 0 : i32
    return %arg0, %c0_i32, %c0_i32_0 : i32, i32, i32
  }
  func.func @transform_1(%arg0: i32) -> (i32, i32) {
    %c0_i32 = arith.constant 0 : i32
    %c0_i32_0 = arith.constant 0 : i32
    %c0_i32_1 = arith.constant 0 : i32
    return %c0_i32, %c0_i32_0 : i32, i32
  }
  func.func @transform_2(%arg0: i32) -> (i32, i32) {
    %c0_i32 = arith.constant 0 : i32
    %c0_i32_0 = arith.constant 0 : i32
    %c0_i32_1 = arith.constant 0 : i32
    return %c0_i32, %c0_i32_0 : i32, i32
  }
  func.func @transform_3(%arg0: i32) -> (i32, i32, i32) {
    %c0_i32 = arith.constant 0 : i32
    %c0_i32_0 = arith.constant 0 : i32
    %c0_i32_1 = arith.constant 0 : i32
    return %arg0, %c0_i32, %c0_i32_0 : i32, i32, i32
  }
}

</mosaic_0001>

<llo_original>
// kernel: tpu_custom_call.1
$region0: #{tpu_custom_call.1}
  #allocation0 [shape = 'u32[]', space=smem, size = 0x4, offset = 0x4, fixed_abs, tag = 'smem constant byte address 0x4 - core index']
  #allocation1 [shape = 'u32[72,128]{1,0:T(1,128)}', space=vmem, size = 0x9000, scoped, tag = 'internal scratch']
  %s0 = inlined_call_operand.hbm [shape: f32[4,32,256], index: 0, kind: input, shape index: {}]
  %s1 = inlined_call_operand.vmem [shape: f32[32,8], index: 1, kind: input, shape index: {}]
  %s2 = inlined_call_operand.vmem [shape: f32[8,32], index: 2, kind: input, shape index: {}]
  %s3 = inlined_call_operand.hbm [shape: f32[4,32,256], index: 3, kind: output, shape index: {}]
  %s4 = sld [smem:[#allocation0]]
  $region26: #{tpu_custom_call.1} parent=0
    _
  %s6 = ssub.s32 1, %s4
  %s7 = scalar_select 0, %s6, %s4
  $region1: #{tpu_custom_call.1} parent=0
    #allocation2 [shape = 'u8[131072]{0}', space=vmem, size = 0x20000, scoped, tag = 'input window, operand 0, single buffered']
    #allocation3 [shape = 's32[1]{0}', space=sflag, size = 0x4, scoped, tag = 'scoped memory for tpu_custom_call.1']
    #allocation4 [shape = 's32[1]{0}', space=sflag, size = 0x4, scoped, tag = 'scoped memory for tpu_custom_call.1']
    #allocation5 [shape = 'u8[131072]{0}', space=vmem, size = 0x20000, scoped, tag = 'output window, operand 0, single buffered']
    %8 = vsyncpa [#allocation3], 0
    %9 = vsyncpa [#allocation4], 0
    // Predicated region
    $region2: #{tpu_custom_call.1} parent=1 // pred_check
      _
    $region3: #{tpu_custom_call.1} parent=1 // pred_check_branch
      %11 = sbr.rel (0) target = $region5
    $region4: #{tpu_custom_call.1} parent=1 // pred_region
      %13 = vsyncadd [#allocation3], 0
      %s14 = sshll.u32 %s0, 4
      %s15 = int_to_ptr.hbm [resolvable:$true] %s14
      %s16 = sshll.u32 [#allocation2], 4
      %s17 = int_to_ptr.vmem [resolvable:$true] %s16
      %22 = dma.hbm_to_vmem [thread:$0]  %s15, 4096, %s17, [#allocation3], 256, 256, 16
    $region5: #{tpu_custom_call.1} parent=1 // pred_fallthru
      _
    // Predicated region
    $region6: #{tpu_custom_call.1} parent=1 // pred_check
      _
    $region7: #{tpu_custom_call.1} parent=1 // pred_check_branch
      %24 = sbr.rel (0) target = $region9
    $region8: #{tpu_custom_call.1} parent=1 // pred_region
      _
    $region9: #{tpu_custom_call.1} parent=1 // pred_fallthru
      _
    // Predicated region
    $region10: #{tpu_custom_call.1} parent=1 // pred_check
      _
    $region11: #{tpu_custom_call.1} parent=1 // pred_check_branch
      %26 = sbr.rel (0) target = $region13
    $region12: #{tpu_custom_call.1} parent=1 // pred_region
      _
    $region13: #{tpu_custom_call.1} parent=1 // pred_fallthru
      _
    // Predicated region
    $region14: #{tpu_custom_call.1} parent=1 // pred_check
      _
    $region15: #{tpu_custom_call.1} parent=1 // pred_check_branch
      %28 = sbr.rel (0) target = $region17
    $region16: #{tpu_custom_call.1} parent=1 // pred_region
      %30 = dma.done [#allocation3], 4096
    $region17: #{tpu_custom_call.1} parent=1 // pred_fallthru
      _
    %v31 = vld [vmem:[#allocation2] sm:$0xff]
    %v32 = vld [vmem:[#allocation2 + $0x8] sm:$0xff]
    %v33 = vld [vmem:[#allocation2 + $0x10] sm:$0xff]
    %v34 = vld [vmem:[#allocation2 + $0x18] sm:$0xff]
    %v35 = vld [vmem:[#allocation2 + $0x20] sm:$0xff]
    %v36 = vld [vmem:[#allocation2 + $0x28] sm:$0xff]
    %v37 = vld [vmem:[#allocation2 + $0x30] sm:$0xff]
    %v38 = vld [vmem:[#allocation2 + $0x38] sm:$0xff]
    %v39 = vld [vmem:[#allocation2 + $0x40] sm:$0xff]
    %v40 = vld [vmem:[#allocation2 + $0x48] sm:$0xff]
    %v41 = vld [vmem:[#allocation2 + $0x50] sm:$0xff]
    %v42 = vld [vmem:[#allocation2 + $0x58] sm:$0xff]
    %v43 = vld [vmem:[#allocation2 + $0x60] sm:$0xff]
    %v44 = vld [vmem:[#allocation2 + $0x68] sm:$0xff]
    %v45 = vld [vmem:[#allocation2 + $0x70] sm:$0xff]
    %v46 = vld [vmem:[#allocation2 + $0x78] sm:$0xff]
    %v47 = vld [vmem:[#allocation2 + $0x80] sm:$0xff]
    %v48 = vld [vmem:[#allocation2 + $0x88] sm:$0xff]
    %v49 = vld [vmem:[#allocation2 + $0x90] sm:$0xff]
    %v50 = vld [vmem:[#allocation2 + $0x98] sm:$0xff]
    %v51 = vld [vmem:[#allocation2 + $0xa0] sm:$0xff]
    %v52 = vld [vmem:[#allocation2 + $0xa8] sm:$0xff]
    %v53 = vld [vmem:[#allocation2 + $0xb0] sm:$0xff]
    %v54 = vld [vmem:[#allocation2 + $0xb8] sm:$0xff]
    %v55 = vld [vmem:[#allocation2 + $0xc0] sm:$0xff]
    %v56 = vld [vmem:[#allocation2 + $0xc8] sm:$0xff]
    %v57 = vld [vmem:[#allocation2 + $0xd0] sm:$0xff]
    %v58 = vld [vmem:[#allocation2 + $0xd8] sm:$0xff]
    %v59 = vld [vmem:[#allocation2 + $0xe0] sm:$0xff]
    %v60 = vld [vmem:[#allocation2 + $0xe8] sm:$0xff]
    %v61 = vld [vmem:[#allocation2 + $0xf0] sm:$0xff]
    %v62 = vld [vmem:[#allocation2 + $0xf8] sm:$0xff]
    %v63 = vadd.f32 %v31, %v32
    %64 = vadd.xlane.f32.xlu0 %v63
    %v65 = vpop.xlane.xlu0 %64
    %v66 = vadd.f32 %v33, %v34
    %67 = vadd.xlane.f32.xlu0 %v66
    %v68 = vpop.xlane.xlu0 %67
    %v69 = vadd.f32 %v35, %v36
    %70 = vadd.xlane.f32.xlu0 %v69
    %v71 = vpop.xlane.xlu0 %70
    %v72 = vadd.f32 %v37, %v38
    %73 = vadd.xlane.f32.xlu0 %v72
    %v74 = vpop.xlane.xlu0 %73
    %v75 = vadd.f32 %v39, %v40
    %76 = vadd.xlane.f32.xlu0 %v75
    %v77 = vpop.xlane.xlu0 %76
    %v78 = vadd.f32 %v41, %v42
    %79 = vadd.xlane.f32.xlu0 %v78
    %v80 = vpop.xlane.xlu0 %79
    %v81 = vadd.f32 %v43, %v44
    %82 = vadd.xlane.f32.xlu0 %v81
    %v83 = vpop.xlane.xlu0 %82
    %v84 = vadd.f32 %v45, %v46
    %85 = vadd.xlane.f32.xlu0 %v84
    %v86 = vpop.xlane.xlu0 %85
    %v87 = vadd.f32 %v47, %v48
    %88 = vadd.xlane.f32.xlu0 %v87
    %v89 = vpop.xlane.xlu0 %88
    %v90 = vadd.f32 %v49, %v50
    %91 = vadd.xlane.f32.xlu0 %v90
    %v92 = vpop.xlane.xlu0 %91
    %v93 = vadd.f32 %v51, %v52
    %94 = vadd.xlane.f32.xlu0 %v93
    %v95 = vpop.xlane.xlu0 %94
    %v96 = vadd.f32 %v53, %v54
    %97 = vadd.xlane.f32.xlu0 %v96
    %v98 = vpop.xlane.xlu0 %97
    %v99 = vadd.f32 %v55, %v56
    %100 = vadd.xlane.f32.xlu0 %v99
    %v101 = vpop.xlane.xlu0 %100
    %v102 = vadd.f32 %v57, %v58
    %103 = vadd.xlane.f32.xlu0 %v102
    %v104 = vpop.xlane.xlu0 %103
    %v105 = vadd.f32 %v59, %v60
    %106 = vadd.xlane.f32.xlu0 %v105
    %v107 = vpop.xlane.xlu0 %106
    %v108 = vadd.f32 %v61, %v62
    %109 = vadd.xlane.f32.xlu0 %v108
    %v110 = vpop.xlane.xlu0 %109
    %v111 = vmul.f32 %v65, 0.00390625
    %v112 = vmul.f32 %v68, 0.00390625
    %v113 = vmul.f32 %v71, 0.00390625
    %v114 = vmul.f32 %v74, 0.00390625
    %v115 = vmul.f32 %v77, 0.00390625
    %v116 = vmul.f32 %v80, 0.00390625
    %v117 = vmul.f32 %v83, 0.00390625
    %v118 = vmul.f32 %v86, 0.00390625
    %v119 = vmul.f32 %v89, 0.00390625
    %v120 = vmul.f32 %v92, 0.00390625
    %v121 = vmul.f32 %v95, 0.00390625
    %v122 = vmul.f32 %v98, 0.00390625
    %v123 = vmul.f32 %v101, 0.00390625
    %v124 = vmul.f32 %v104, 0.00390625
    %v125 = vmul.f32 %v107, 0.00390625
    %v126 = vmul.f32 %v110, 0.00390625
    %v127 = vld [vmem:[%s1] sm:$0xff]
    %v128 = vld [vmem:[%s1 + $0x8] sm:$0xff]
    %v129 = vld [vmem:[%s1 + $0x10] sm:$0xff]
    %v130 = vld [vmem:[%s1 + $0x18] sm:$0xff]
    %v147 = vlaneseq
    %v148 = vand.u32 %v147, 127
    %v149 = vperm.slane %v111, %v148
    %v150 = vadd.s32 %v148, 4294967288
    %v151 = vperm.slane %v112, %v150
    %vm152 = vcmask 130112
    %v153 = vsel %vm152, %v151, %v149
    %v154 = vadd.s32 %v148, 4294967280
    %v155 = vperm.slane %v113, %v154
    %vm156 = vcmask 195712
    %v157 = vsel %vm156, %v155, %v153
    %v158 = vadd.s32 %v148, 4294967272
    %v159 = vperm.slane %v114, %v158
    %vm160 = vcmask 261312
    %v161 = vsel %vm160, %v159, %v157
    %v162 = vperm.slane %v115, %v148
    %v163 = vperm.slane %v116, %v150
    %v164 = vsel %vm152, %v163, %v162
    %v165 = vperm.slane %v117, %v154
    %v166 = vsel %vm156, %v165, %v164
    %v167 = vperm.slane %v118, %v158
    %v168 = vsel %vm160, %v167, %v166
    %v169 = vperm.slane %v119, %v148
    %v170 = vperm.slane %v120, %v150
    %v171 = vsel %vm152, %v170, %v169
    %v172 = vperm.slane %v121, %v154
    %v173 = vsel %vm156, %v172, %v171
    %v174 = vperm.slane %v122, %v158
    %v175 = vsel %vm160, %v174, %v173
    %v176 = vperm.slane %v123, %v148
    %v177 = vperm.slane %v124, %v150
    %v178 = vsel %vm152, %v177, %v176
    %v179 = vperm.slane %v125, %v154
    %v180 = vsel %vm156, %v179, %v178
    %v181 = vperm.slane %v126, %v158
    %v182 = vsel %vm160, %v181, %v180
    %vm183 = vcmask 1041409
    %v184 = vsel %vm183, %v168, %v161
    %vm185 = vcmask 1042434
    %v186 = vsel %vm185, %v175, %v184
    %vm187 = vcmask 1043459
    %v188 = vsel %vm187, %v182, %v186
    %vm189 = vcmask 261120
    %v190 = vsel %vm189, %v188, 0
    %192 = vmatpush.msra.mxu0 0.0
    %193 = vmatpush.msra.mxu0 0.0
    %194 = vmatpush.msra.mxu0 0.0
    %195 = vmatpush.msra.mxu0 0.0
    %196 = vmatpush.msra.mxu0 0.0
    %197 = vmatpush.msra.mxu0 0.0
    %198 = vmatpush.msra.mxu0 0.0
    %199 = vmatpush.msra.mxu0 0.0
    %200 = vmatpush.msra.mxu0 0.0
    %201 = vmatpush.msra.mxu0 0.0
    %202 = vmatpush.msra.mxu0 0.0
    %203 = vmatpush.msra.mxu0 0.0
    %204 = vmatpush.msra.mxu0 %v130
    %205 = vmatpush.msra.mxu0 %v129
    %206 = vmatpush.msra.mxu0 %v128
    %207 = vmatpush.msra.mxu0 %v127
    %208 = vmatmul.f32.gmra.mxu0 %v190
    %v209 = vpop.f32.mrf.mxu0
    %v210 = vadd.f32 0.0, %v209
    %211 = vdwg.mxu0
    %v212 = vmax.f32 %v210, 0.0
    %v213 = vld [vmem:[%s2] sm:$0xff]
    %vm214 = vcmask 64512
    %v216 = vsel %vm214, %v212, 0
    %218 = vmatpush.msra.mxu0 0.0
    %219 = vmatpush.msra.mxu0 0.0
    %220 = vmatpush.msra.mxu0 0.0
    %221 = vmatpush.msra.mxu0 0.0
    %222 = vmatpush.msra.mxu0 0.0
    %223 = vmatpush.msra.mxu0 0.0
    %224 = vmatpush.msra.mxu0 0.0
    %225 = vmatpush.msra.mxu0 0.0
    %226 = vmatpush.msra.mxu0 0.0
    %227 = vmatpush.msra.mxu0 0.0
    %228 = vmatpush.msra.mxu0 0.0
    %229 = vmatpush.msra.mxu0 0.0
    %230 = vmatpush.msra.mxu0 0.0
    %231 = vmatpush.msra.mxu0 0.0
    %232 = vmatpush.msra.mxu0 0.0
    %233 = vmatpush.msra.mxu0 %v213
    %234 = vmatmul.f32.gmra.mxu0 %v216
    %v235 = vpop.f32.mrf.mxu0
    %v236 = vadd.f32 0.0, %v235
    %237 = vdwg.mxu0
    %v238 = vxor.u32 %v236, 2147483648
    %v239 = vmul.f32 %v238, 1.442695
    %v240 = vpow.pop %v239
    %v241 = vadd.f32 %v240, 1.0
    %v242 = vrcp.pop %v241
    %v243 = vmul.f32 %v241, %v242
    %v244 = vsub.f32 1.0, %v243
    %v245 = vmul.f32 %v242, %v244
    %v246 = vadd.f32 %v242, %v245
    %vm247 = vweird.f32 %v241
    %vm248 = vweird.f32 %v242
    %vm249 = vmor %vm247, %vm248
    %v250 = vsel %vm249, %v242, %v246
    %v251 = vand.u32 2147483647, %v241
    %vm252 = vcmp.eq.f32.partialorder %v251, 8.507059e+37
    %v253 = vand.u32 %v241, 2147483648
    %v254 = vor.u32 1.1754944e-38, %v253
    %v255 = vsel %vm252, %v254, %v250
    %v256 = vmul.f32 1.0, %v255
    %v257 = vperm.slane %v256, 0
    %v258 = vlaneseq
    %v259 = vshrl.u32 %v258, 7
    %261 = vset.pattern.permute.xlu0 %v259
    %262 = vperm.xlu0 %261, %v257
    %v263 = vpop.permute.xlu0 %262
    %v264 = vlaneseq
    %v265 = vshrl.u32 %v264, 7
    %v266 = vadd.s32 %v265, 8
    %267 = vset.pattern.permute.xlu0 %v266
    %268 = vperm.xlu0 %267, %v257
    %v269 = vpop.permute.xlu0 %268
    %v270 = vlaneseq
    %v271 = vshrl.u32 %v270, 7
    %v272 = vadd.s32 %v271, 16
    %273 = vset.pattern.permute.xlu0 %v272
    %274 = vperm.xlu0 %273, %v257
    %v275 = vpop.permute.xlu0 %274
    %v276 = vlaneseq
    %v277 = vshrl.u32 %v276, 7
    %v278 = vadd.s32 %v277, 24
    %279 = vset.pattern.permute.xlu0 %v278
    %280 = vperm.xlu0 %279, %v257
    %v281 = vpop.permute.xlu0 %280
    %v282 = vperm.slane %v256, 1
    %v283 = vlaneseq
    %v284 = vshrl.u32 %v283, 7
    %286 = vset.pattern.permute.xlu0 %v284
    %287 = vperm.xlu0 %286, %v282
    %v288 = vpop.permute.xlu0 %287
    %v289 = vlaneseq
    %v290 = vshrl.u32 %v289, 7
    %v291 = vadd.s32 %v290, 8
    %292 = vset.pattern.permute.xlu0 %v291
    %293 = vperm.xlu0 %292, %v282
    %v294 = vpop.permute.xlu0 %293
    %v295 = vlaneseq
    %v296 = vshrl.u32 %v295, 7
    %v297 = vadd.s32 %v296, 16
    %298 = vset.pattern.permute.xlu0 %v297
    %299 = vperm.xlu0 %298, %v282
    %v300 = vpop.permute.xlu0 %299
    %v301 = vlaneseq
    %v302 = vshrl.u32 %v301, 7
    %v303 = vadd.s32 %v302, 24
    %304 = vset.pattern.permute.xlu0 %v303
    %305 = vperm.xlu0 %304, %v282
    %v306 = vpop.permute.xlu0 %305
    %v307 = vperm.slane %v256, 2
    %v308 = vlaneseq
    %v309 = vshrl.u32 %v308, 7
    %311 = vset.pattern.permute.xlu0 %v309
    %312 = vperm.xlu0 %311, %v307
    %v313 = vpop.permute.xlu0 %312
    %v314 = vlaneseq
    %v315 = vshrl.u32 %v314, 7
    %v316 = vadd.s32 %v315, 8
    %317 = vset.pattern.permute.xlu0 %v316
    %318 = vperm.xlu0 %317, %v307
    %v319 = vpop.permute.xlu0 %318
    %v320 = vlaneseq
    %v321 = vshrl.u32 %v320, 7
    %v322 = vadd.s32 %v321, 16
    %323 = vset.pattern.permute.xlu0 %v322
    %324 = vperm.xlu0 %323, %v307
    %v325 = vpop.permute.xlu0 %324
    %v326 = vlaneseq
    %v327 = vshrl.u32 %v326, 7
    %v328 = vadd.s32 %v327, 24
    %329 = vset.pattern.permute.xlu0 %v328
    %330 = vperm.xlu0 %329, %v307
    %v331 = vpop.permute.xlu0 %330
    %v332 = vperm.slane %v256, 3
    %v333 = vlaneseq
    %v334 = vshrl.u32 %v333, 7
    %336 = vset.pattern.permute.xlu0 %v334
    %337 = vperm.xlu0 %336, %v332
    %v338 = vpop.permute.xlu0 %337
    %v339 = vlaneseq
    %v340 = vshrl.u32 %v339, 7
    %v341 = vadd.s32 %v340, 8
    %342 = vset.pattern.permute.xlu0 %v341
    %343 = vperm.xlu0 %342, %v332
    %v344 = vpop.permute.xlu0 %343
    %v345 = vlaneseq
    %v346 = vshrl.u32 %v345, 7
    %v347 = vadd.s32 %v346, 16
    %348 = vset.pattern.permute.xlu0 %v347
    %349 = vperm.xlu0 %348, %v332
    %v350 = vpop.permute.xlu0 %349
    %v351 = vlaneseq
    %v352 = vshrl.u32 %v351, 7
    %v353 = vadd.s32 %v352, 24
    %354 = vset.pattern.permute.xlu0 %v353
    %355 = vperm.xlu0 %354, %v332
    %v356 = vpop.permute.xlu0 %355
    %v357 = vmul.f32 %v31, %v263
    %v358 = vmul.f32 %v32, %v263
    %v359 = vmul.f32 %v33, %v269
    %v360 = vmul.f32 %v34, %v269
    %v361 = vmul.f32 %v35, %v275
    %v362 = vmul.f32 %v36, %v275
    %v363 = vmul.f32 %v37, %v281
    %v364 = vmul.f32 %v38, %v281
    %v365 = vmul.f32 %v39, %v288
    %v366 = vmul.f32 %v40, %v288
    %v367 = vmul.f32 %v41, %v294
    %v368 = vmul.f32 %v42, %v294
    %v369 = vmul.f32 %v43, %v300
    %v370 = vmul.f32 %v44, %v300
    %v371 = vmul.f32 %v45, %v306
    %v372 = vmul.f32 %v46, %v306
    %v373 = vmul.f32 %v47, %v313
    %v374 = vmul.f32 %v48, %v313
    %v375 = vmul.f32 %v49, %v319
    %v376 = vmul.f32 %v50, %v319
    %v377 = vmul.f32 %v51, %v325
    %v378 = vmul.f32 %v52, %v325
    %v379 = vmul.f32 %v53, %v331
    %v380 = vmul.f32 %v54, %v331
    %v381 = vmul.f32 %v55, %v338
    %v382 = vmul.f32 %v56, %v338
    %v383 = vmul.f32 %v57, %v344
    %v384 = vmul.f32 %v58, %v344
    %v385 = vmul.f32 %v59, %v350
    %v386 = vmul.f32 %v60, %v350
    %v387 = vmul.f32 %v61, %v356
    %v388 = vmul.f32 %v62, %v356
    %389 = vst [vmem:[#allocation5] sm:$0xff] %v357
    %390 = vst [vmem:[#allocation5 + $0x8] sm:$0xff] %v358
    %391 = vst [vmem:[#allocation5 + $0x10] sm:$0xff] %v359
    %392 = vst [vmem:[#allocation5 + $0x18] sm:$0xff] %v360
    %393 = vst [vmem:[#allocation5 + $0x20] sm:$0xff] %v361
    %394 = vst [vmem:[#allocation5 + $0x28] sm:$0xff] %v362
    %395 = vst [vmem:[#allocation5 + $0x30] sm:$0xff] %v363
    %396 = vst [vmem:[#allocation5 + $0x38] sm:$0xff] %v364
    %397 = vst [vmem:[#allocation5 + $0x40] sm:$0xff] %v365
    %398 = vst [vmem:[#allocation5 + $0x48] sm:$0xff] %v366
    %399 = vst [vmem:[#allocation5 + $0x50] sm:$0xff] %v367
    %400 = vst [vmem:[#allocation5 + $0x58] sm:$0xff] %v368
    %401 = vst [vmem:[#allocation5 + $0x60] sm:$0xff] %v369
    %402 = vst [vmem:[#allocation5 + $0x68] sm:$0xff] %v370
    %403 = vst [vmem:[#allocation5 + $0x70] sm:$0xff] %v371
    %404 = vst [vmem:[#allocation5 + $0x78] sm:$0xff] %v372
    %405 = vst [vmem:[#allocation5 + $0x80] sm:$0xff] %v373
    %406 = vst [vmem:[#allocation5 + $0x88] sm:$0xff] %v374
    %407 = vst [vmem:[#allocation5 + $0x90] sm:$0xff] %v375
    %408 = vst [vmem:[#allocation5 + $0x98] sm:$0xff] %v376
    %409 = vst [vmem:[#allocation5 + $0xa0] sm:$0xff] %v377
    %410 = vst [vmem:[#allocation5 + $0xa8] sm:$0xff] %v378
    %411 = vst [vmem:[#allocation5 + $0xb0] sm:$0xff] %v379
    %412 = vst [vmem:[#allocation5 + $0xb8] sm:$0xff] %v380
    %413 = vst [vmem:[#allocation5 + $0xc0] sm:$0xff] %v381
    %414 = vst [vmem:[#allocation5 + $0xc8] sm:$0xff] %v382
    %415 = vst [vmem:[#allocation5 + $0xd0] sm:$0xff] %v383
    %416 = vst [vmem:[#allocation5 + $0xd8] sm:$0xff] %v384
    %417 = vst [vmem:[#allocation5 + $0xe0] sm:$0xff] %v385
    %418 = vst [vmem:[#allocation5 + $0xe8] sm:$0xff] %v386
    %419 = vst [vmem:[#allocation5 + $0xf0] sm:$0xff] %v387
    %420 = vst [vmem:[#allocation5 + $0xf8] sm:$0xff] %v388
    // Predicated region
    $region18: #{tpu_custom_call.1} parent=1 // pred_check
      _
    $region19: #{tpu_custom_call.1} parent=1 // pred_check_branch
      %422 = sbr.rel (0) target = $region21
    $region20: #{tpu_custom_call.1} parent=1 // pred_region
      %424 = vsyncadd [#allocation4], 0
      %s425 = sshll.u32 [#allocation5], 4
      %s426 = int_to_ptr.vmem [resolvable:$true] %s425
      %s427 = sshll.u32 %s3, 4
      %s428 = int_to_ptr.hbm [resolvable:$true] %s427
      %433 = dma.vmem_to_hbm [thread:$0]  %s426, 4096, %s428, [#allocation4], 256, 256, 16
    $region21: #{tpu_custom_call.1} parent=1 // pred_fallthru
      _
    // Predicated region
    $region22: #{tpu_custom_call.1} parent=1 // pred_check
      _
    $region23: #{tpu_custom_call.1} parent=1 // pred_check_branch
      %435 = sbr.rel (0) target = $region25
    $region24: #{tpu_custom_call.1} parent=1 // pred_region
      %437 = dma.done [#allocation4], 4096
    $region25: #{tpu_custom_call.1} parent=1 // pred_fallthru
      _
    %438 = vsyncpa [#allocation3], 1
    %439 = vsyncpa [#allocation4], 1

</llo_original>
